<compile_context>
chip_gen: v6e
topology: v6e:2x2x1
jax: 0.10.0
libtpu: 0.0.40
codegen_flags: <defaults>
</compile_context>

<pallas_src>
import jax
import jax.numpy as jnp
import numpy as np
from jax.experimental import pallas as pl
from jax.experimental.pallas import tpu as pltpu


def _make_ks_kernel(n, tr, lanes, inner, needs_mask):
    full_rows = n // lanes   # rows that are fully valid
    rem = n % lanes          # valid lanes in the (possibly) partial row

    def kernel(tpr_ref, fpr_ref, out_ref, acc_ref):
        c = pl.program_id(0)   # parallel split (TensorCores on v7x)
        j = pl.program_id(1)   # reduction steps within this split

        @pl.when(j == 0)
        def _():
            acc_ref[...] = jnp.full((tr, lanes), -jnp.inf, jnp.float32)

        # Narrow dtype travelled over HBM; cast + subtract on the VPU.
        d = tpr_ref[...].astype(jnp.float32) - fpr_ref[...].astype(jnp.float32)

        if needs_mask:
            # Mask the lane-pad tail, the partial trailing block, and any
            # clamped duplicate blocks (their unclamped logical index lands
            # past the array, so every element of them is masked).
            r = c * inner + j  # unclamped logical block index
            row = jax.lax.broadcasted_iota(jnp.int32, (tr, lanes), 0)
            col = jax.lax.broadcasted_iota(jnp.int32, (tr, lanes), 1)
            grow = r * tr + row
            valid = (grow < full_rows) | ((grow == full_rows) & (col < rem))
            d = jnp.where(valid, d, -jnp.inf)

        # Pure VPU running elementwise max; no per-step cross-lane reduce.
        acc_ref[...] = jnp.maximum(acc_ref[...], d)

        @pl.when(j == pl.num_programs(1) - 1)
        def _():
            a = acc_ref[...]
            if tr % 8 == 0:
                # Fold (tr,128) -> (8,128) with elementwise (VPU) maxes.
                folded = jnp.max(a.reshape(tr // 8, 8, lanes), axis=0)
            else:
                # Tiny-input fallback (tr == rows < 8, not a multiple of 8).
                folded = jnp.full((8, lanes), jnp.max(a), jnp.float32)
            out_ref[0, :, :] = folded

    return kernel


def bi_cls_ks(tpr: jax.Array, fpr: jax.Array, *, tile_rows: int = 2048,
              nsplit: int = 2) -> jax.Array:
    """KS = max(max(tpr - fpr), 0), computed in a Pallas TPU kernel."""
    assert tpr.shape == fpr.shape, "tpr and fpr must have the same shape"

    tpr_f = jnp.ravel(tpr)
    fpr_f = jnp.ravel(fpr)
    n = int(tpr_f.shape[0])
    assert n > 0, "inputs must be non-empty"

    lanes = 128
    rows = pl.cdiv(n, lanes)
    padded = rows * lanes
    if padded != n:
        # Minimal (<128 elem) tail pad just so the free 1-D -> 2-D reshape is
        # legal; padded elements are masked to -inf inside the kernel.
        tpr_f = jnp.pad(tpr_f, (0, padded - n))
        fpr_f = jnp.pad(fpr_f, (0, padded - n))
    tpr2 = tpr_f.reshape(rows, lanes)
    fpr2 = fpr_f.reshape(rows, lanes)

    tr = min(tile_rows, rows)            # block rows (full dim if small)
    row_blocks = pl.cdiv(rows, tr)       # reduction steps in total
    ns = min(nsplit, row_blocks)         # parallel split (2 TCs on v7x)
    inner = pl.cdiv(row_blocks, ns)      # steps per split
    needs_mask = (padded != n) or (rows % tr != 0)

    kernel = _make_ks_kernel(n, tr, lanes, inner, needs_mask)

    def in_map(c, j):
        # Clamp out-of-range logical blocks to the last real block; the kernel
        # masks them (or max() is idempotent on duplicated valid data).
        return (jnp.minimum(c * inner + j, row_blocks - 1), 0)

    partial = pl.pallas_call(
        kernel,
        out_shape=jax.ShapeDtypeStruct((ns, 8, lanes), jnp.float32),
        grid=(ns, inner),
        in_specs=[
            pl.BlockSpec((tr, lanes), in_map),
            pl.BlockSpec((tr, lanes), in_map),
        ],
        out_specs=pl.BlockSpec((1, 8, lanes), lambda c, j: (c, 0, 0)),
        scratch_shapes=[pltpu.VMEM((tr, lanes), jnp.float32)],
        compiler_params=pltpu.CompilerParams(
            dimension_semantics=("parallel", "arbitrary")),
    )(tpr2, fpr2)

    # Tiny final reduce of the (ns, 8, 128) partial maxima + clamp at 0.
    return jnp.maximum(jnp.max(partial), jnp.float32(0.0))


def _ref_ks(tpr_np: np.ndarray, fpr_np: np.ndarray) -> float:
    return max(float(np.max(tpr_np.astype(np.float32)
                            - fpr_np.astype(np.float32))), 0.0)


if __name__ == "__main__":
    key = jax.random.PRNGKey(0)
    k1, k2 = jax.random.split(key)

    # ROC-style curves; n NOT a multiple of 128 -> exercises the tail mask.
    n = 1000
    tpr = jnp.sort(jax.random.uniform(k1, (n,), dtype=jnp.float32))
    fpr = jnp.sort(jax.random.uniform(k2, (n,), dtype=jnp.float32)) * 0.8

    ks = jax.block_until_ready(bi_cls_ks(tpr, fpr))
    ks_ref = _ref_ks(np.asarray(tpr), np.asarray(fpr))
    assert abs(float(ks) - ks_ref) < 1e-6, (float(ks), ks_ref)

    # bf16 path: narrow dtype stays narrow through the DMA, lane-aligned size.
    k3, k4 = jax.random.split(k2)
    tpr_b = jax.random.uniform(k3, (2048,), dtype=jnp.float32).astype(jnp.bfloat16)
    fpr_b = (jax.random.uniform(k4, (2048,), dtype=jnp.float32) * 0.8).astype(jnp.bfloat16)
    ks_b = jax.block_until_ready(bi_cls_ks(tpr_b, fpr_b))
    ks_b_ref = _ref_ks(np.asarray(tpr_b.astype(jnp.float32)),
                       np.asarray(fpr_b.astype(jnp.float32)))
    assert abs(float(ks_b) - ks_b_ref) < 1e-5, (float(ks_b), ks_b_ref)

    # Small tiles -> exercises multi-block grid, 2-way split, partial trailing
    # block AND clamped-duplicate-block paths.
    k5, k6 = jax.random.split(k4)
    tpr_m = jax.random.uniform(k5, (3067,), dtype=jnp.float32)
    fpr_m = jax.random.uniform(k6, (3067,), dtype=jnp.float32) * 0.8
    ks_m = jax.block_until_ready(bi_cls_ks(tpr_m, fpr_m, tile_rows=8))
    ks_m_ref = _ref_ks(np.asarray(tpr_m), np.asarray(fpr_m))
    assert abs(float(ks_m) - ks_m_ref) < 1e-6, (float(ks_m), ks_m_ref)

    print("KERNEL_OK")
</pallas_src>

<mosaic_0001>
module attributes {stable_mosaic.version = 11 : i64} {
  func.func @kernel(%arg0: i32, %arg1: i32, %arg2: memref<8x128xf32, #tpu.memory_space<vmem>>, %arg3: memref<8x128xf32, #tpu.memory_space<vmem>>, %arg4: memref<1x8x128xf32, #tpu.memory_space<vmem>>, %arg5: memref<8x128xf32, #tpu.memory_space<vmem>>) attributes {dimension_semantics = [#tpu.dimension_semantics<parallel>, #tpu.dimension_semantics<arbitrary>], iteration_bounds = array<i64: 1, 1>, scalar_prefetch = 0 : i64, scratch_operands = 1 : i64, tpu.core_type = #tpu.core_type<tc>, window_params = [{transform_indices = @transform_0, window_bounds = array<i64: 8, 128>}, {transform_indices = @transform_1, window_bounds = array<i64: 8, 128>}, {transform_indices = @transform_2, window_bounds = array<i64: 1, 8, 128>}]} {
    %c0_i32 = arith.constant 0 : i32
    %0 = arith.cmpi eq, %arg1, %c0_i32 : i32
    %1 = arith.extui %0 : i1 to i32
    %c0_i32_0 = arith.constant 0 : i32
    %2 = arith.cmpi ne, %1, %c0_i32_0 : i32
    scf.if %2 {
      %cst_11 = arith.constant 0xFF800000 : f32
      %29 = vector.broadcast %cst_11 : f32 to vector<8x128xf32>
      %c0_12 = arith.constant 0 : index
      %c0_13 = arith.constant 0 : index
      %30 = vector.load %arg5[%c0_12, %c0_13] : memref<8x128xf32, #tpu.memory_space<vmem>>, vector<8x128xf32>
      tpu.vector_store %arg5[%c0_12, %c0_13], %29 {strides = array<i32>} : memref<8x128xf32, #tpu.memory_space<vmem>>, vector<8x128xf32>,
    } else {
    }
    %c0 = arith.constant 0 : index
    %c0_1 = arith.constant 0 : index
    %3 = vector.load %arg2[%c0, %c0_1] : memref<8x128xf32, #tpu.memory_space<vmem>>, vector<8x128xf32>
    %c0_2 = arith.constant 0 : index
    %c0_3 = arith.constant 0 : index
    %4 = vector.load %arg3[%c0_2, %c0_3] : memref<8x128xf32, #tpu.memory_space<vmem>>, vector<8x128xf32>
    %5 = arith.subf %3, %4 : vector<8x128xf32>
    %c1_i32 = arith.constant 1 : i32
    %6 = arith.muli %arg0, %c1_i32 : i32
    %7 = arith.addi %6, %arg1 : i32
    %8 = tpu.iota {dimensions = array<i32: 0>} : vector<8x128xi32>
    %9 = tpu.iota {dimensions = array<i32: 1>} : vector<8x128xi32>
    %c8_i32 = arith.constant 8 : i32
    %10 = arith.muli %7, %c8_i32 : i32
    %11 = vector.broadcast %10 : i32 to vector<8x128xi32>
    %12 = arith.addi %11, %8 : vector<8x128xi32>
    %c7_i32 = arith.constant 7 : i32
    %13 = vector.broadcast %c7_i32 : i32 to vector<8x128xi32>
    %14 = arith.cmpi slt, %12, %13 : vector<8x128xi32>
    %c7_i32_4 = arith.constant 7 : i32
    %15 = vector.broadcast %c7_i32_4 : i32 to vector<8x128xi32>
    %16 = arith.cmpi eq, %12, %15 : vector<8x128xi32>
    %c104_i32 = arith.constant 104 : i32
    %17 = vector.broadcast %c104_i32 : i32 to vector<8x128xi32>
    %18 = arith.cmpi slt, %9, %17 : vector<8x128xi32>
    %19 = arith.andi %16, %18 : vector<8x128xi1>
    %20 = arith.ori %14, %19 : vector<8x128xi1>
    %cst = arith.constant 0xFF800000 : f32
    %21 = vector.broadcast %cst : f32 to vector<8x128xf32>
    %22 = arith.select %20, %5, %21 : vector<8x128xi1>, vector<8x128xf32>
    %c0_5 = arith.constant 0 : index
    %c0_6 = arith.constant 0 : index
    %23 = vector.load %arg5[%c0_5, %c0_6] : memref<8x128xf32, #tpu.memory_space<vmem>>, vector<8x128xf32>
    %24 = arith.maximumf %23, %22 : vector<8x128xf32>
    %c0_7 = arith.constant 0 : index
    %c0_8 = arith.constant 0 : index
    %25 = vector.load %arg5[%c0_7, %c0_8] : memref<8x128xf32, #tpu.memory_space<vmem>>, vector<8x128xf32>
    tpu.vector_store %arg5[%c0_7, %c0_8], %24 {strides = array<i32>} : memref<8x128xf32, #tpu.memory_space<vmem>>, vector<8x128xf32>,
    %c0_i32_9 = arith.constant 0 : i32
    %26 = arith.cmpi eq, %arg1, %c0_i32_9 : i32
    %27 = arith.extui %26 : i1 to i32
    %c0_i32_10 = arith.constant 0 : i32
    %28 = arith.cmpi ne, %27, %c0_i32_10 : i32
    scf.if %28 {
      %c0_11 = arith.constant 0 : index
      %c0_12 = arith.constant 0 : index
      %29 = vector.load %arg5[%c0_11, %c0_12] : memref<8x128xf32, #tpu.memory_space<vmem>>, vector<8x128xf32>
      %30 = vector.shape_cast %29 : vector<8x128xf32> to vector<1x8x128xf32>
      %cst_13 = arith.constant dense<0xFF800000> : vector<8x128xf32>
      %31 = vector.multi_reduction <maximumf>, %30, %cst_13 [0] : vector<1x8x128xf32> to vector<8x128xf32>
      %c0_14 = arith.constant 0 : index
      %c0_15 = arith.constant 0 : index
      %c0_16 = arith.constant 0 : index
      %32 = vector.load %arg4[%c0_14, %c0_15, %c0_16] : memref<1x8x128xf32, #tpu.memory_space<vmem>>, vector<1x8x128xf32>
      %33 = vector.shape_cast %32 : vector<1x8x128xf32> to vector<8x128xf32>
      %34 = vector.shape_cast %31 : vector<8x128xf32> to vector<1x8x128xf32>
      tpu.vector_store %arg4[%c0_14, %c0_15, %c0_16], %34 {strides = array<i32>} : memref<1x8x128xf32, #tpu.memory_space<vmem>>, vector<1x8x128xf32>,
    } else {
    }
    return
  }
  func.func @transform_0(%arg0: i32, %arg1: i32) -> (i32, i32) {
    %c1_i32 = arith.constant 1 : i32
    %0 = arith.muli %arg0, %c1_i32 : i32
    %1 = arith.addi %0, %arg1 : i32
    %c0_i32 = arith.constant 0 : i32
    %2 = arith.minsi %1, %c0_i32 : i32
    %c0_i32_0 = arith.constant 0 : i32
    %c0_i32_1 = arith.constant 0 : i32
    return %2, %c0_i32_0 : i32, i32
  }
  func.func @transform_1(%arg0: i32, %arg1: i32) -> (i32, i32) {
    %c1_i32 = arith.constant 1 : i32
    %0 = arith.muli %arg0, %c1_i32 : i32
    %1 = arith.addi %0, %arg1 : i32
    %c0_i32 = arith.constant 0 : i32
    %2 = arith.minsi %1, %c0_i32 : i32
    %c0_i32_0 = arith.constant 0 : i32
    %c0_i32_1 = arith.constant 0 : i32
    return %2, %c0_i32_0 : i32, i32
  }
  func.func @transform_2(%arg0: i32, %arg1: i32) -> (i32, i32, i32) {
    %c0_i32 = arith.constant 0 : i32
    %c0_i32_0 = arith.constant 0 : i32
    %c0_i32_1 = arith.constant 0 : i32
    return %arg0, %c0_i32, %c0_i32_0 : i32, i32, i32
  }
}

</mosaic_0001>

<llo_original>
// kernel: tpu_custom_call.1
$region0: #{tpu_custom_call.1}
  #allocation0 [shape = 'u32[]', space=smem, size = 0x4, offset = 0x4, fixed_abs, tag = 'smem constant byte address 0x4 - core index']
  #allocation1 [shape = 'u32[144,128]{1,0:T(1,128)}', space=vmem, size = 0x12000, scoped, tag = 'internal scratch']
  #allocation2 [shape = 'f32[8,128]{1,0:T(8,128)}', space=vmem, size = 0x1000, scoped, tag = 'scratch operand']
  %s0 = inlined_call_operand.hbm [shape: f32[8,128], index: 0, kind: input, shape index: {}]
  %s1 = inlined_call_operand.hbm [shape: f32[8,128], index: 1, kind: input, shape index: {}]
  %s2 = inlined_call_operand.hbm [shape: f32[1,8,128], index: 2, kind: output, shape index: {}]
  %s3 = sld [smem:[#allocation0]]
  $region34: #{tpu_custom_call.1} parent=0
    _
  %s5 = ssub.s32 1, %s3
  %s6 = scalar_select 0, %s5, %s3
  $region1: #{tpu_custom_call.1} parent=0
    #allocation3 [shape = 'u8[4096]{0}', space=vmem, size = 0x1000, scoped, tag = 'input window, operand 0, single buffered']
    #allocation4 [shape = 's32[1]{0}', space=sflag, size = 0x4, scoped, tag = 'scoped memory for tpu_custom_call.1']
    #allocation5 [shape = 's32[1]{0}', space=sflag, size = 0x4, scoped, tag = 'scoped memory for tpu_custom_call.1']
    #allocation6 [shape = 'u8[4096]{0}', space=vmem, size = 0x1000, scoped, tag = 'input window, operand 1, single buffered']
    #allocation7 [shape = 's32[1]{0}', space=sflag, size = 0x4, scoped, tag = 'scoped memory for tpu_custom_call.1']
    #allocation8 [shape = 'u8[4096]{0}', space=vmem, size = 0x1000, scoped, tag = 'output window, operand 0, single buffered']
    %7 = vsyncpa [#allocation4], 0
    %8 = vsyncpa [#allocation7], 0
    %9 = vsyncpa [#allocation5], 0
    // Predicated region
    $region2: #{tpu_custom_call.1} parent=1 // pred_check
      _
    $region3: #{tpu_custom_call.1} parent=1 // pred_check_branch
      %11 = sbr.rel (0) target = $region5
    $region4: #{tpu_custom_call.1} parent=1 // pred_region
      %s12 = sadd.s32 0, 0
      %p13 = scmp.lt.s32.totalorder %s12, 0
      %s14 = scalar_select %p13, %s12, 0
      %s16 = ssub.s32 128, 128
      %17 = vsyncadd [#allocation4], %s16
      %s18 = smul.addr %s14, 128
      %s19 = scalar_lea.hbm %s0, %s18
      %s21 = sshll.u32 [#allocation3], 4
      %s22 = int_to_ptr.vmem [resolvable:$true] %s21
      %24 = dma.hbm_to_vmem [thread:$0]  %s19, 128, %s22, [#allocation4]
    $region5: #{tpu_custom_call.1} parent=1 // pred_fallthru
      _
    // Predicated region
    $region6: #{tpu_custom_call.1} parent=1 // pred_check
      _
    $region7: #{tpu_custom_call.1} parent=1 // pred_check_branch
      %26 = sbr.rel (0) target = $region9
    $region8: #{tpu_custom_call.1} parent=1 // pred_region
      %s27 = sadd.s32 0, 0
      %p28 = scmp.lt.s32.totalorder %s27, 0
      %s29 = scalar_select %p28, %s27, 0
      %s31 = ssub.s32 128, 128
      %32 = vsyncadd [#allocation7], %s31
      %s33 = smul.addr %s29, 128
      %s34 = scalar_lea.hbm %s1, %s33
      %s36 = sshll.u32 [#allocation6], 4
      %s37 = int_to_ptr.vmem [resolvable:$true] %s36
      %39 = dma.hbm_to_vmem [thread:$0]  %s34, 128, %s37, [#allocation7]
    $region9: #{tpu_custom_call.1} parent=1 // pred_fallthru
      _
    // Predicated region
    $region10: #{tpu_custom_call.1} parent=1 // pred_check
      _
    $region11: #{tpu_custom_call.1} parent=1 // pred_check_branch
      %41 = sbr.rel (0) target = $region13
    $region12: #{tpu_custom_call.1} parent=1 // pred_region
      %42 = dma.done [#allocation4], 128
    $region13: #{tpu_custom_call.1} parent=1 // pred_fallthru
      _
    // Predicated region
    $region14: #{tpu_custom_call.1} parent=1 // pred_check
      _
    $region15: #{tpu_custom_call.1} parent=1 // pred_check_branch
      %44 = sbr.rel (0) target = $region17
    $region16: #{tpu_custom_call.1} parent=1 // pred_region
      %45 = dma.done [#allocation7], 128
    $region17: #{tpu_custom_call.1} parent=1 // pred_fallthru
      _
    %s46 = sadd.s32 0, 0
    %p47 = scmp.lt.s32.totalorder %s46, 0
    %s48 = scalar_select %p47, %s46, 0
    %s49 = sadd.s32 0, 0
    %p50 = scmp.lt.s32.totalorder %s49, 0
    %s51 = scalar_select %p50, %s49, 0
    %p52 = scmp.eq.s32.totalorder 0, 0
    // Predicated region
    $region18: #{tpu_custom_call.1} parent=1 // pred_check
      %p53 = pneg %p52
    $region19: #{tpu_custom_call.1} parent=1 // pred_check_branch
      %55 = sbr.rel (%p53) target = $region21
    $region20: #{tpu_custom_call.1} parent=1 // pred_region
      %56 = vst [vmem:[#allocation2] sm:$0xff] -inf
    $region21: #{tpu_custom_call.1} parent=1 // pred_fallthru
      _
    %v57 = vld [vmem:[#allocation3] sm:$0xff]
    %v58 = vld [vmem:[#allocation6] sm:$0xff]
    %v59 = vsub.f32 %v57, %v58
    %s60 = sadd.s32 0, 0
    %v61 = vlaneseq
    %v62 = vshrl.u32 %v61, 7
    %v63 = vlaneseq
    %v64 = vand.u32 %v63, 127
    %s65 = smul.u32 %s60, 8
    %v66 = vstv %s65
    %v67 = vadd.s32 %v66, %v62
    %vm68 = vcmp.lt.s32.totalorder %v67, 7
    %vm69 = vcmp.eq.s32.totalorder %v67, 7
    %vm70 = vcmp.lt.s32.totalorder %v64, 104
    %vm71 = vmand %vm69, %vm70
    %vm72 = vmor %vm68, %vm71
    %v73 = vsel %vm72, %v59, -inf
    %v74 = vld [vmem:[#allocation2] sm:$0xff]
    %v75 = vmax.f32 %v74, %v73
    %76 = vst [vmem:[#allocation2] sm:$0xff] %v75
    // Predicated region
    $region22: #{tpu_custom_call.1} parent=1 // pred_check
      %p77 = pneg %p52
    $region23: #{tpu_custom_call.1} parent=1 // pred_check_branch
      %79 = sbr.rel (%p77) target = $region25
    $region24: #{tpu_custom_call.1} parent=1 // pred_region
      %v80 = vld [vmem:[#allocation2] sm:$0xff]
      %81 = vst [vmem:[#allocation8] sm:$0xff] %v80
    $region25: #{tpu_custom_call.1} parent=1 // pred_fallthru
      _
    // Predicated region
    $region26: #{tpu_custom_call.1} parent=1 // pred_check
      _
    $region27: #{tpu_custom_call.1} parent=1 // pred_check_branch
      %83 = sbr.rel (0) target = $region29
    $region28: #{tpu_custom_call.1} parent=1 // pred_region
      %s85 = ssub.s32 128, 128
      %86 = vsyncadd [#allocation5], %s85
      %s88 = sshll.u32 [#allocation8], 4
      %s89 = int_to_ptr.vmem [resolvable:$true] %s88
      %91 = dma.vmem_to_hbm [thread:$0]  %s89, 128, %s2, [#allocation5]
    $region29: #{tpu_custom_call.1} parent=1 // pred_fallthru
      _
    // Predicated region
    $region30: #{tpu_custom_call.1} parent=1 // pred_check
      _
    $region31: #{tpu_custom_call.1} parent=1 // pred_check_branch
      %93 = sbr.rel (0) target = $region33
    $region32: #{tpu_custom_call.1} parent=1 // pred_region
      %94 = dma.done [#allocation5], 128
    $region33: #{tpu_custom_call.1} parent=1 // pred_fallthru
      _
    %95 = vsyncpa [#allocation4], 1
    %96 = vsyncpa [#allocation7], 1
    %97 = vsyncpa [#allocation5], 1

</llo_original>
